<compile_context>
chip_gen: v5e
topology: v5e:2x2
jax: 0.10.0
libtpu: 0.0.40
codegen_flags: <defaults>
</compile_context>

<pallas_src>
import functools

import jax
import jax.numpy as jnp
from jax import lax
from jax.experimental import pallas as pl
from jax.experimental.pallas import tpu as pltpu


def _lstm_fc_kernel(x_ref, wih_ref, whh_ref, b_ref, wfc_ref, bfc_ref,
                    out_ref, xp_ref, h_ref, c_ref, *, seq_len, needs_mask):
    """One (batch_tile, time_chunk) grid step of the LSTM recurrence.

    x_ref   : (TC, Bt, F)   time-major input chunk
    wih_ref : (F, 4H)       input weight (transposed), gate order [i|f|g|o]
    whh_ref : (H, 4H)       recurrent weight (transposed)
    b_ref   : (1, 4H)       b_ih + b_hh
    wfc_ref : (H, O)        fc weight (transposed)
    bfc_ref : (1, O)        fc bias
    out_ref : (Bt, O)       fc(h_T) for this batch tile
    xp_ref  : (TC, Bt, 4H)  VMEM scratch: chunk input projection
    h_ref/c_ref : (Bt, H)   VMEM scratch: recurrent state (persists over chunks)
    """
    t_chunk = pl.program_id(1)
    n_chunks = pl.num_programs(1)

    TC, Bt, F = x_ref.shape
    H = whh_ref.shape[0]
    G = whh_ref.shape[1]          # 4H

    # New batch tile -> reset the recurrent state.
    @pl.when(t_chunk == 0)
    def _():
        h_ref[...] = jnp.zeros_like(h_ref)
        c_ref[...] = jnp.zeros_like(c_ref)

    # Chunk-level input projection: one matmul per chunk (off the serial
    # per-step critical path); the 4H-wide result never touches HBM.
    x2d = x_ref[...].reshape(TC * Bt, F)
    xp = jnp.dot(x2d, wih_ref[...], preferred_element_type=jnp.float32)
    xp_ref[...] = (xp + b_ref[...]).reshape(TC, Bt, G)

    whh = whh_ref[...]            # resident for the whole chunk

    # Lane mask selecting the tanh gate (g) inside the [i|f|g|o] layout.
    lane = lax.broadcasted_iota(jnp.int32, (Bt, G), 1)
    is_g = jnp.logical_and(lane >= 2 * H, lane < 3 * H)

    chunk_base = t_chunk * TC

    def step(t, carry):
        h, c = carry
        gates = xp_ref[t] + jnp.dot(h, whh, preferred_element_type=jnp.float32)
        # One full-width sigmoid + one full-width tanh, lane-mask select.
        act = jnp.where(is_g, jnp.tanh(gates), jax.nn.sigmoid(gates))
        i_g = act[:, 0 * H:1 * H]
        f_g = act[:, 1 * H:2 * H]
        g_g = act[:, 2 * H:3 * H]
        o_g = act[:, 3 * H:4 * H]
        c_new = f_g * c + i_g * g_g
        h_new = o_g * jnp.tanh(c_new)
        if needs_mask:            # only traced when T was padded
            valid = (chunk_base + t) < seq_len
            h_new = jnp.where(valid, h_new, h)
            c_new = jnp.where(valid, c_new, c)
        return h_new, c_new

    h0 = h_ref[...]
    c0 = c_ref[...]
    h_T, c_T = lax.fori_loop(0, TC, step, (h0, c0), unroll=min(TC, 8))
    h_ref[...] = h_T
    c_ref[...] = c_T

    # fc(last hidden state), once per batch tile.
    @pl.when(t_chunk == n_chunks - 1)
    def _():
        out = jnp.dot(h_T, wfc_ref[...], preferred_element_type=jnp.float32)
        out_ref[...] = (out + bfc_ref[...]).astype(out_ref.dtype)


def lstm_model_forward(x, params, *, t_chunk=16, b_tile=8):
    """x: [B, T, F] float32 (batch_first).  Returns [B, O] = fc(h_T)."""
    B, T, F = x.shape
    wih_t, whh_t, bih, bhh, wfc_t, bfc = params
    H = whh_t.shape[0]
    G = 4 * H
    O = wfc_t.shape[1]

    n_t = -(-T // t_chunk)        # cdiv
    T_pad = n_t * t_chunk
    n_b = -(-B // b_tile)
    B_pad = n_b * b_tile

    # Time-major + padded.  Padded batch rows are sliced off at the end; padded
    # time steps are masked inside the kernel so h/c freeze at step T-1.
    x_tm = jnp.transpose(x, (1, 0, 2))
    x_tm = jnp.pad(x_tm, ((0, T_pad - T), (0, B_pad - B), (0, 0)))

    bias = (bih + bhh).reshape(1, G)
    bfc2 = bfc.reshape(1, O)

    kernel = functools.partial(_lstm_fc_kernel, seq_len=T,
                               needs_mask=(T_pad != T))

    out = pl.pallas_call(
        kernel,
        out_shape=jax.ShapeDtypeStruct((B_pad, O), jnp.float32),
        grid_spec=pltpu.PrefetchScalarGridSpec(
            num_scalar_prefetch=0,
            grid=(n_b, n_t),
            in_specs=[
                pl.BlockSpec((t_chunk, b_tile, F), lambda b, t: (t, b, 0)),
                pl.BlockSpec((F, G), lambda b, t: (0, 0)),
                pl.BlockSpec((H, G), lambda b, t: (0, 0)),
                pl.BlockSpec((1, G), lambda b, t: (0, 0)),
                pl.BlockSpec((H, O), lambda b, t: (0, 0)),
                pl.BlockSpec((1, O), lambda b, t: (0, 0)),
            ],
            out_specs=pl.BlockSpec((b_tile, O), lambda b, t: (b, 0)),
            scratch_shapes=[
                pltpu.VMEM((t_chunk, b_tile, G), jnp.float32),  # xp chunk
                pltpu.VMEM((b_tile, H), jnp.float32),           # h state
                pltpu.VMEM((b_tile, H), jnp.float32),           # c state
            ],
        ),
        compiler_params=pltpu.CompilerParams(
            dimension_semantics=("parallel", "arbitrary")),
    )(x_tm, wih_t, whh_t, bias, wfc_t, bfc2)
    return out[:B]


def init_params(key, input_size, hidden_size, output_size):
    """Deterministic init mirroring PyTorch's U(-1/sqrt(H), 1/sqrt(H))."""
    ks = jax.random.split(key, 6)
    bound = 1.0 / jnp.sqrt(hidden_size)
    wih = jax.random.uniform(ks[0], (4 * hidden_size, input_size), jnp.float32, -bound, bound)
    whh = jax.random.uniform(ks[1], (4 * hidden_size, hidden_size), jnp.float32, -bound, bound)
    bih = jax.random.uniform(ks[2], (4 * hidden_size,), jnp.float32, -bound, bound)
    bhh = jax.random.uniform(ks[3], (4 * hidden_size,), jnp.float32, -bound, bound)
    wfc = jax.random.uniform(ks[4], (output_size, hidden_size), jnp.float32, -bound, bound)
    bfc = jax.random.uniform(ks[5], (output_size,), jnp.float32, -bound, bound)
    # pass transposed weights so the kernel does plain row-major matmuls
    return (wih.T, whh.T, bih, bhh, wfc.T, bfc)


def reference_forward(x, params):
    """Pure-JAX reference of the same forward (correctness check)."""
    wih_t, whh_t, bih, bhh, wfc_t, bfc = params
    B = x.shape[0]
    H = whh_t.shape[0]
    prec = lax.Precision.HIGHEST

    def step(carry, x_t):
        h, c = carry
        gates = (jnp.dot(x_t, wih_t, precision=prec)
                 + jnp.dot(h, whh_t, precision=prec) + bih + bhh)
        i = jax.nn.sigmoid(gates[:, 0 * H:1 * H])
        f = jax.nn.sigmoid(gates[:, 1 * H:2 * H])
        g = jnp.tanh(gates[:, 2 * H:3 * H])
        o = jax.nn.sigmoid(gates[:, 3 * H:4 * H])
        c = f * c + i * g
        h = o * jnp.tanh(c)
        return (h, c), None

    h0 = jnp.zeros((B, H), jnp.float32)
    c0 = jnp.zeros((B, H), jnp.float32)
    (hT, _), _ = lax.scan(step, (h0, c0), jnp.transpose(x, (1, 0, 2)))
    return jnp.dot(hT, wfc_t, precision=prec) + bfc


if __name__ == "__main__":
    B, T, F, H, O = 2, 8, 2, 32, 4   # input_size = len(feature_cols) = 2

    key = jax.random.PRNGKey(0)
    kx, kp = jax.random.split(key)
    x = jax.random.normal(kx, (B, T, F), jnp.float32)
    params = init_params(kp, F, H, O)

    ref = reference_forward(x, params)

    # Multi-chunk path: T split into 2 chunks, h/c carried in VMEM scratch.
    out_a = jax.block_until_ready(lstm_model_forward(x, params, t_chunk=4))
    # Padded-time path: T padded 8 -> 16, padded steps masked in-kernel.
    out_b = jax.block_until_ready(lstm_model_forward(x, params, t_chunk=16))

    assert out_a.shape == (B, O)
    assert jnp.allclose(out_a, ref, atol=1e-5, rtol=1e-5), (out_a, ref)
    assert jnp.allclose(out_b, ref, atol=1e-5, rtol=1e-5), (out_b, ref)

    print("KERNEL_OK")
</pallas_src>

<mosaic_0001>
module attributes {stable_mosaic.version = 11 : i64} {
  func.func @_lstm_fc_kernel(%arg0: i32, %arg1: i32, %arg2: memref<4x8x2xf32, #tpu.memory_space<vmem>>, %arg3: memref<2x128xf32, #tpu.memory_space<vmem>>, %arg4: memref<32x128xf32, #tpu.memory_space<vmem>>, %arg5: memref<1x128xf32, #tpu.memory_space<vmem>>, %arg6: memref<32x4xf32, #tpu.memory_space<vmem>>, %arg7: memref<1x4xf32, #tpu.memory_space<vmem>>, %arg8: memref<8x4xf32, #tpu.memory_space<vmem>>, %arg9: memref<4x8x128xf32, #tpu.memory_space<vmem>>, %arg10: memref<8x32xf32, #tpu.memory_space<vmem>>, %arg11: memref<8x32xf32, #tpu.memory_space<vmem>>) attributes {dimension_semantics = [#tpu.dimension_semantics<parallel>, #tpu.dimension_semantics<arbitrary>], iteration_bounds = array<i64: 1, 2>, scalar_prefetch = 0 : i64, scratch_operands = 3 : i64, tpu.core_type = #tpu.core_type<tc>, window_params = [{transform_indices = @transform_0, window_bounds = array<i64: 4, 8, 2>}, {pipeline_mode = #tpu.pipeline_mode<synchronous>, transform_indices = @transform_1, window_bounds = array<i64: 2, 128>}, {pipeline_mode = #tpu.pipeline_mode<synchronous>, transform_indices = @transform_2, window_bounds = array<i64: 32, 128>}, {pipeline_mode = #tpu.pipeline_mode<synchronous>, transform_indices = @transform_3, window_bounds = array<i64: 1, 128>}, {pipeline_mode = #tpu.pipeline_mode<synchronous>, transform_indices = @transform_4, window_bounds = array<i64: 32, 4>}, {pipeline_mode = #tpu.pipeline_mode<synchronous>, transform_indices = @transform_5, window_bounds = array<i64: 1, 4>}, {transform_indices = @transform_6, window_bounds = array<i64: 8, 4>}]} {
    %c0_i32 = arith.constant 0 : i32
    %0 = arith.cmpi eq, %arg1, %c0_i32 : i32
    %1 = arith.extui %0 : i1 to i32
    %c0_i32_0 = arith.constant 0 : i32
    %2 = arith.cmpi ne, %1, %c0_i32_0 : i32
    scf.if %2 {
      %cst_39 = arith.constant 0.000000e+00 : f32
      %110 = vector.broadcast %cst_39 : f32 to vector<8x32xf32>
      %c0_40 = arith.constant 0 : index
      %c0_41 = arith.constant 0 : index
      %111 = vector.load %arg10[%c0_40, %c0_41] : memref<8x32xf32, #tpu.memory_space<vmem>>, vector<8x32xf32>
      tpu.vector_store %arg10[%c0_40, %c0_41], %110 {strides = array<i32>} : memref<8x32xf32, #tpu.memory_space<vmem>>, vector<8x32xf32>,
      %cst_42 = arith.constant 0.000000e+00 : f32
      %112 = vector.broadcast %cst_42 : f32 to vector<8x32xf32>
      %c0_43 = arith.constant 0 : index
      %c0_44 = arith.constant 0 : index
      %113 = vector.load %arg11[%c0_43, %c0_44] : memref<8x32xf32, #tpu.memory_space<vmem>>, vector<8x32xf32>
      tpu.vector_store %arg11[%c0_43, %c0_44], %112 {strides = array<i32>} : memref<8x32xf32, #tpu.memory_space<vmem>>, vector<8x32xf32>,
    } else {
    }
    %c0 = arith.constant 0 : index
    %c0_1 = arith.constant 0 : index
    %c0_2 = arith.constant 0 : index
    %3 = vector.load %arg2[%c0, %c0_1, %c0_2] : memref<4x8x2xf32, #tpu.memory_space<vmem>>, vector<4x8x2xf32>
    %4 = vector.shape_cast %3 : vector<4x8x2xf32> to vector<32x2xf32>
    %c0_3 = arith.constant 0 : index
    %c0_4 = arith.constant 0 : index
    %5 = vector.load %arg3[%c0_3, %c0_4] : memref<2x128xf32, #tpu.memory_space<vmem>>, vector<2x128xf32>
    %cst = arith.constant dense<0.000000e+00> : vector<32x128xf32>
    %6 = tpu.matmul %4, %5, %cst {dimension_numbers = #tpu.dot_dimension_numbers<[1], [0], [0], [1], [0, 0, 1, 1], [], []>} : vector<32x2xf32>, vector<2x128xf32>, vector<32x128xf32> -> vector<32x128xf32>
    %c0_5 = arith.constant 0 : index
    %c0_6 = arith.constant 0 : index
    %7 = vector.load %arg5[%c0_5, %c0_6] : memref<1x128xf32, #tpu.memory_space<vmem>>, vector<1x128xf32>
    %8 = vector.broadcast %7 : vector<1x128xf32> to vector<32x128xf32>
    %9 = arith.addf %6, %8 : vector<32x128xf32>
    %10 = vector.shape_cast %9 : vector<32x128xf32> to vector<4x8x128xf32>
    %c0_7 = arith.constant 0 : index
    %c0_8 = arith.constant 0 : index
    %c0_9 = arith.constant 0 : index
    %11 = vector.load %arg9[%c0_7, %c0_8, %c0_9] : memref<4x8x128xf32, #tpu.memory_space<vmem>>, vector<4x8x128xf32>
    tpu.vector_store %arg9[%c0_7, %c0_8, %c0_9], %10 {strides = array<i32>} : memref<4x8x128xf32, #tpu.memory_space<vmem>>, vector<4x8x128xf32>,
    %c0_10 = arith.constant 0 : index
    %c0_11 = arith.constant 0 : index
    %12 = vector.load %arg4[%c0_10, %c0_11] : memref<32x128xf32, #tpu.memory_space<vmem>>, vector<32x128xf32>
    %13 = tpu.iota {dimensions = array<i32: 1>} : vector<8x128xi32>
    %c64_i32 = arith.constant 64 : i32
    %14 = vector.broadcast %c64_i32 : i32 to vector<8x128xi32>
    %15 = arith.cmpi sge, %13, %14 : vector<8x128xi32>
    %c96_i32 = arith.constant 96 : i32
    %16 = vector.broadcast %c96_i32 : i32 to vector<8x128xi32>
    %17 = arith.cmpi slt, %13, %16 : vector<8x128xi32>
    %18 = arith.andi %15, %17 : vector<8x128xi1>
    %c0_12 = arith.constant 0 : index
    %c0_13 = arith.constant 0 : index
    %19 = vector.load %arg10[%c0_12, %c0_13] : memref<8x32xf32, #tpu.memory_space<vmem>>, vector<8x32xf32>
    %c0_14 = arith.constant 0 : index
    %c0_15 = arith.constant 0 : index
    %20 = vector.load %arg11[%c0_14, %c0_15] : memref<8x32xf32, #tpu.memory_space<vmem>>, vector<8x32xf32>
    %c0_i32_16 = arith.constant 0 : i32
    %21 = arith.index_cast %c0_i32_16 : i32 to index
    %c0_17 = arith.constant 0 : index
    %c0_18 = arith.constant 0 : index
    %22 = vector.load %arg9[%21, %c0_17, %c0_18] : memref<4x8x128xf32, #tpu.memory_space<vmem>>, vector<1x8x128xf32>
    %23 = vector.shape_cast %22 : vector<1x8x128xf32> to vector<8x128xf32>
    %cst_19 = arith.constant dense<0.000000e+00> : vector<8x128xf32>
    %24 = tpu.matmul %19, %12, %cst_19 {dimension_numbers = #tpu.dot_dimension_numbers<[1], [0], [0], [1], [0, 0, 1, 1], [], []>} : vector<8x32xf32>, vector<32x128xf32>, vector<8x128xf32> -> vector<8x128xf32>
    %25 = arith.addf %23, %24 : vector<8x128xf32>
    %26 = math.tanh %25 : vector<8x128xf32>
    %27 = arith.negf %25 : vector<8x128xf32>
    %28 = math.exp %27 : vector<8x128xf32>
    %cst_20 = arith.constant 1.000000e+00 : f32
    %29 = vector.broadcast %cst_20 : f32 to vector<8x128xf32>
    %30 = arith.addf %29, %28 : vector<8x128xf32>
    %31 = arith.divf %29, %30 : vector<8x128xf32>
    %32 = arith.select %18, %26, %31 : vector<8x128xi1>, vector<8x128xf32>
    %33 = vector.extract_strided_slice %32 {offsets = [0, 0], sizes = [8, 32], strides = [1, 1]} : vector<8x128xf32> to vector<8x32xf32>
    %34 = vector.extract_strided_slice %32 {offsets = [0, 32], sizes = [8, 32], strides = [1, 1]} : vector<8x128xf32> to vector<8x32xf32>
    %35 = vector.extract_strided_slice %32 {offsets = [0, 64], sizes = [8, 32], strides = [1, 1]} : vector<8x128xf32> to vector<8x32xf32>
    %36 = vector.extract_strided_slice %32 {offsets = [0, 96], sizes = [8, 32], strides = [1, 1]} : vector<8x128xf32> to vector<8x32xf32>
    %37 = arith.mulf %34, %20 : vector<8x32xf32>
    %38 = arith.mulf %33, %35 : vector<8x32xf32>
    %39 = arith.addf %37, %38 : vector<8x32xf32>
    %40 = math.tanh %39 : vector<8x32xf32>
    %41 = arith.mulf %36, %40 : vector<8x32xf32>
    %c1_i32 = arith.constant 1 : i32
    %42 = arith.index_cast %c1_i32 : i32 to index
    %c0_21 = arith.constant 0 : index
    %c0_22 = arith.constant 0 : index
    %43 = vector.load %arg9[%42, %c0_21, %c0_22] : memref<4x8x128xf32, #tpu.memory_space<vmem>>, vector<1x8x128xf32>
    %44 = vector.shape_cast %43 : vector<1x8x128xf32> to vector<8x128xf32>
    %cst_23 = arith.constant dense<0.000000e+00> : vector<8x128xf32>
    %45 = tpu.matmul %41, %12, %cst_23 {dimension_numbers = #tpu.dot_dimension_numbers<[1], [0], [0], [1], [0, 0, 1, 1], [], []>} : vector<8x32xf32>, vector<32x128xf32>, vector<8x128xf32> -> vector<8x128xf32>
    %46 = arith.addf %44, %45 : vector<8x128xf32>
    %47 = math.tanh %46 : vector<8x128xf32>
    %48 = arith.negf %46 : vector<8x128xf32>
    %49 = math.exp %48 : vector<8x128xf32>
    %cst_24 = arith.constant 1.000000e+00 : f32
    %50 = vector.broadcast %cst_24 : f32 to vector<8x128xf32>
    %51 = arith.addf %50, %49 : vector<8x128xf32>
    %52 = arith.divf %50, %51 : vector<8x128xf32>
    %53 = arith.select %18, %47, %52 : vector<8x128xi1>, vector<8x128xf32>
    %54 = vector.extract_strided_slice %53 {offsets = [0, 0], sizes = [8, 32], strides = [1, 1]} : vector<8x128xf32> to vector<8x32xf32>
    %55 = vector.extract_strided_slice %53 {offsets = [0, 32], sizes = [8, 32], strides = [1, 1]} : vector<8x128xf32> to vector<8x32xf32>
    %56 = vector.extract_strided_slice %53 {offsets = [0, 64], sizes = [8, 32], strides = [1, 1]} : vector<8x128xf32> to vector<8x32xf32>
    %57 = vector.extract_strided_slice %53 {offsets = [0, 96], sizes = [8, 32], strides = [1, 1]} : vector<8x128xf32> to vector<8x32xf32>
    %58 = arith.mulf %55, %39 : vector<8x32xf32>
    %59 = arith.mulf %54, %56 : vector<8x32xf32>
    %60 = arith.addf %58, %59 : vector<8x32xf32>
    %61 = math.tanh %60 : vector<8x32xf32>
    %62 = arith.mulf %57, %61 : vector<8x32xf32>
    %c2_i32 = arith.constant 2 : i32
    %63 = arith.index_cast %c2_i32 : i32 to index
    %c0_25 = arith.constant 0 : index
    %c0_26 = arith.constant 0 : index
    %64 = vector.load %arg9[%63, %c0_25, %c0_26] : memref<4x8x128xf32, #tpu.memory_space<vmem>>, vector<1x8x128xf32>
    %65 = vector.shape_cast %64 : vector<1x8x128xf32> to vector<8x128xf32>
    %cst_27 = arith.constant dense<0.000000e+00> : vector<8x128xf32>
    %66 = tpu.matmul %62, %12, %cst_27 {dimension_numbers = #tpu.dot_dimension_numbers<[1], [0], [0], [1], [0, 0, 1, 1], [], []>} : vector<8x32xf32>, vector<32x128xf32>, vector<8x128xf32> -> vector<8x128xf32>
    %67 = arith.addf %65, %66 : vector<8x128xf32>
    %68 = math.tanh %67 : vector<8x128xf32>
    %69 = arith.negf %67 : vector<8x128xf32>
    %70 = math.exp %69 : vector<8x128xf32>
    %cst_28 = arith.constant 1.000000e+00 : f32
    %71 = vector.broadcast %cst_28 : f32 to vector<8x128xf32>
    %72 = arith.addf %71, %70 : vector<8x128xf32>
    %73 = arith.divf %71, %72 : vector<8x128xf32>
    %74 = arith.select %18, %68, %73 : vector<8x128xi1>, vector<8x128xf32>
    %75 = vector.extract_strided_slice %74 {offsets = [0, 0], sizes = [8, 32], strides = [1, 1]} : vector<8x128xf32> to vector<8x32xf32>
    %76 = vector.extract_strided_slice %74 {offsets = [0, 32], sizes = [8, 32], strides = [1, 1]} : vector<8x128xf32> to vector<8x32xf32>
    %77 = vector.extract_strided_slice %74 {offsets = [0, 64], sizes = [8, 32], strides = [1, 1]} : vector<8x128xf32> to vector<8x32xf32>
    %78 = vector.extract_strided_slice %74 {offsets = [0, 96], sizes = [8, 32], strides = [1, 1]} : vector<8x128xf32> to vector<8x32xf32>
    %79 = arith.mulf %76, %60 : vector<8x32xf32>
    %80 = arith.mulf %75, %77 : vector<8x32xf32>
    %81 = arith.addf %79, %80 : vector<8x32xf32>
    %82 = math.tanh %81 : vector<8x32xf32>
    %83 = arith.mulf %78, %82 : vector<8x32xf32>
    %c3_i32 = arith.constant 3 : i32
    %84 = arith.index_cast %c3_i32 : i32 to index
    %c0_29 = arith.constant 0 : index
    %c0_30 = arith.constant 0 : index
    %85 = vector.load %arg9[%84, %c0_29, %c0_30] : memref<4x8x128xf32, #tpu.memory_space<vmem>>, vector<1x8x128xf32>
    %86 = vector.shape_cast %85 : vector<1x8x128xf32> to vector<8x128xf32>
    %cst_31 = arith.constant dense<0.000000e+00> : vector<8x128xf32>
    %87 = tpu.matmul %83, %12, %cst_31 {dimension_numbers = #tpu.dot_dimension_numbers<[1], [0], [0], [1], [0, 0, 1, 1], [], []>} : vector<8x32xf32>, vector<32x128xf32>, vector<8x128xf32> -> vector<8x128xf32>
    %88 = arith.addf %86, %87 : vector<8x128xf32>
    %89 = math.tanh %88 : vector<8x128xf32>
    %90 = arith.negf %88 : vector<8x128xf32>
    %91 = math.exp %90 : vector<8x128xf32>
    %cst_32 = arith.constant 1.000000e+00 : f32
    %92 = vector.broadcast %cst_32 : f32 to vector<8x128xf32>
    %93 = arith.addf %92, %91 : vector<8x128xf32>
    %94 = arith.divf %92, %93 : vector<8x128xf32>
    %95 = arith.select %18, %89, %94 : vector<8x128xi1>, vector<8x128xf32>
    %96 = vector.extract_strided_slice %95 {offsets = [0, 0], sizes = [8, 32], strides = [1, 1]} : vector<8x128xf32> to vector<8x32xf32>
    %97 = vector.extract_strided_slice %95 {offsets = [0, 32], sizes = [8, 32], strides = [1, 1]} : vector<8x128xf32> to vector<8x32xf32>
    %98 = vector.extract_strided_slice %95 {offsets = [0, 64], sizes = [8, 32], strides = [1, 1]} : vector<8x128xf32> to vector<8x32xf32>
    %99 = vector.extract_strided_slice %95 {offsets = [0, 96], sizes = [8, 32], strides = [1, 1]} : vector<8x128xf32> to vector<8x32xf32>
    %100 = arith.mulf %97, %81 : vector<8x32xf32>
    %101 = arith.mulf %96, %98 : vector<8x32xf32>
    %102 = arith.addf %100, %101 : vector<8x32xf32>
    %103 = math.tanh %102 : vector<8x32xf32>
    %104 = arith.mulf %99, %103 : vector<8x32xf32>
    %c4_i32 = arith.constant 4 : i32
    %c0_33 = arith.constant 0 : index
    %c0_34 = arith.constant 0 : index
    %105 = vector.load %arg10[%c0_33, %c0_34] : memref<8x32xf32, #tpu.memory_space<vmem>>, vector<8x32xf32>
    tpu.vector_store %arg10[%c0_33, %c0_34], %104 {strides = array<i32>} : memref<8x32xf32, #tpu.memory_space<vmem>>, vector<8x32xf32>,
    %c0_35 = arith.constant 0 : index
    %c0_36 = arith.constant 0 : index
    %106 = vector.load %arg11[%c0_35, %c0_36] : memref<8x32xf32, #tpu.memory_space<vmem>>, vector<8x32xf32>
    tpu.vector_store %arg11[%c0_35, %c0_36], %102 {strides = array<i32>} : memref<8x32xf32, #tpu.memory_space<vmem>>, vector<8x32xf32>,
    %c1_i32_37 = arith.constant 1 : i32
    %107 = arith.cmpi eq, %arg1, %c1_i32_37 : i32
    %108 = arith.extui %107 : i1 to i32
    %c0_i32_38 = arith.constant 0 : i32
    %109 = arith.cmpi ne, %108, %c0_i32_38 : i32
    scf.if %109 {
      %c0_39 = arith.constant 0 : index
      %c0_40 = arith.constant 0 : index
      %110 = vector.load %arg6[%c0_39, %c0_40] : memref<32x4xf32, #tpu.memory_space<vmem>>, vector<32x4xf32>
      %cst_41 = arith.constant dense<0.000000e+00> : vector<8x4xf32>
      %111 = tpu.matmul %104, %110, %cst_41 {dimension_numbers = #tpu.dot_dimension_numbers<[1], [0], [0], [1], [0, 0, 1, 1], [], []>} : vector<8x32xf32>, vector<32x4xf32>, vector<8x4xf32> -> vector<8x4xf32>
      %c0_42 = arith.constant 0 : index
      %c0_43 = arith.constant 0 : index
      %112 = vector.load %arg7[%c0_42, %c0_43] : memref<1x4xf32, #tpu.memory_space<vmem>>, vector<1x4xf32>
      %113 = vector.broadcast %112 : vector<1x4xf32> to vector<8x4xf32>
      %114 = arith.addf %111, %113 : vector<8x4xf32>
      %c0_44 = arith.constant 0 : index
      %c0_45 = arith.constant 0 : index
      %115 = vector.load %arg8[%c0_44, %c0_45] : memref<8x4xf32, #tpu.memory_space<vmem>>, vector<8x4xf32>
      tpu.vector_store %arg8[%c0_44, %c0_45], %114 {strides = array<i32>} : memref<8x4xf32, #tpu.memory_space<vmem>>, vector<8x4xf32>,
    } else {
    }
    return
  }
  func.func @transform_0(%arg0: i32, %arg1: i32) -> (i32, i32, i32) {
    %c0_i32 = arith.constant 0 : i32
    %c0_i32_0 = arith.constant 0 : i32
    return %arg1, %arg0, %c0_i32 : i32, i32, i32
  }
  func.func @transform_1(%arg0: i32, %arg1: i32) -> (i32, i32) {
    %c0_i32 = arith.constant 0 : i32
    %c0_i32_0 = arith.constant 0 : i32
    %c0_i32_1 = arith.constant 0 : i32
    return %c0_i32, %c0_i32_0 : i32, i32
  }
  func.func @transform_2(%arg0: i32, %arg1: i32) -> (i32, i32) {
    %c0_i32 = arith.constant 0 : i32
    %c0_i32_0 = arith.constant 0 : i32
    %c0_i32_1 = arith.constant 0 : i32
    return %c0_i32, %c0_i32_0 : i32, i32
  }
  func.func @transform_3(%arg0: i32, %arg1: i32) -> (i32, i32) {
    %c0_i32 = arith.constant 0 : i32
    %c0_i32_0 = arith.constant 0 : i32
    %c0_i32_1 = arith.constant 0 : i32
    return %c0_i32, %c0_i32_0 : i32, i32
  }
  func.func @transform_4(%arg0: i32, %arg1: i32) -> (i32, i32) {
    %c0_i32 = arith.constant 0 : i32
    %c0_i32_0 = arith.constant 0 : i32
    %c0_i32_1 = arith.constant 0 : i32
    return %c0_i32, %c0_i32_0 : i32, i32
  }
  func.func @transform_5(%arg0: i32, %arg1: i32) -> (i32, i32) {
    %c0_i32 = arith.constant 0 : i32
    %c0_i32_0 = arith.constant 0 : i32
    %c0_i32_1 = arith.constant 0 : i32
    return %c0_i32, %c0_i32_0 : i32, i32
  }
  func.func @transform_6(%arg0: i32, %arg1: i32) -> (i32, i32) {
    %c0_i32 = arith.constant 0 : i32
    %c0_i32_0 = arith.constant 0 : i32
    return %arg0, %c0_i32 : i32, i32
  }
}

</mosaic_0001>

<llo_original>
// kernel: tpu_custom_call.1
$region0: #{tpu_custom_call.1}
  #allocation0 [shape = 'u32[]', space=smem, size = 0x4, offset = 0x4, fixed_abs, tag = 'smem constant byte address 0x4 - core index']
  #allocation1 [shape = 'u32[72,128]{1,0:T(1,128)}', space=vmem, size = 0x9000, scoped, tag = 'internal scratch']
  #allocation2 [shape = 'f32[4,8,128]{2,1,0:T(8,128)}', space=vmem, size = 0x4000, scoped, tag = 'scratch operand']
  #allocation3 [shape = 'f32[8,32]{1,0:T(8,128)}', space=vmem, size = 0x1000, scoped, tag = 'scratch operand']
  #allocation4 [shape = 'f32[8,32]{1,0:T(8,128)}', space=vmem, size = 0x1000, scoped, tag = 'scratch operand']
  %s0 = inlined_call_operand.vmem [shape: f32[8,8,2], index: 0, kind: input, shape index: {}]
  %s1 = inlined_call_operand.vmem [shape: f32[2,128], index: 1, kind: input, shape index: {}]
  %s2 = inlined_call_operand.vmem [shape: f32[32,128], index: 2, kind: input, shape index: {}]
  %s3 = inlined_call_operand.vmem [shape: f32[1,128], index: 3, kind: input, shape index: {}]
  %s4 = inlined_call_operand.vmem [shape: f32[32,4], index: 4, kind: input, shape index: {}]
  %s5 = inlined_call_operand.vmem [shape: f32[1,4], index: 5, kind: input, shape index: {}]
  %s6 = inlined_call_operand.vmem [shape: f32[8,4], index: 6, kind: output, shape index: {}]
  %s7 = sld [smem:[#allocation0]]
  $region65: #{tpu_custom_call.1} parent=0
    _
  %s9 = ssub.s32 1, %s7
  %s10 = scalar_select 0, %s9, %s7
  loop: start=0, step=1, limit=4
  $region2: #{tpu_custom_call.1} parent=0 // loop_pre_header
    _
  $region3: #{tpu_custom_call.1} parent=0 // loop_header
    %s12 = sphi 0, %s16
    %p13 = scmp.ge.s32.totalorder %s12, 4
    %s19 = sphi 0, %s31
    %s20 = sphi 0, %s27
    %s21 = sphi 0, %s19
    %s22 = sphi 0, %s20
    %s23 = sphi 0, %s21
    %s24 = sphi 0, %s22
    %s36 = sphi 0, %s38
    %s39 = sphi 0, %s36
    %s40 = sphi 0, %s39
    %s56 = sphi 0, %s40
    %s60 = sphi 0, %s60
    %s62 = sphi 0, %s60
    %s63 = sphi 0, %s62
    %s77 = sphi 0, %s63
    %s81 = sphi 0, %s81
    %s83 = sphi 0, %s81
    %s84 = sphi 0, %s83
    %s98 = sphi 0, %s84
    %s102 = sphi 0, %s102
    %s104 = sphi 0, %s102
    %s105 = sphi 0, %s104
    %s119 = sphi 0, %s105
    %s123 = sphi 0, %s123
    %s125 = sphi 0, %s123
    %s126 = sphi 0, %s125
    %s140 = sphi 0, %s126
    %s144 = sphi 0, %s144
    %s146 = sphi 0, %s144
    %s147 = sphi 0, %s146
    %s161 = sphi 0, %s147
    %s167 = sphi 0, %s169
    %s170 = sphi 0, %s167
    %s171 = sphi 0, %s170
    %s187 = sphi 0, %s171
  $region4: #{tpu_custom_call.1} parent=0 // loop_header_branch
    %15 = sbr.rel (%p13) target = $region8
  $region5: #{tpu_custom_call.1} parent=0 // loop_body
    %s17 = ssub.s32 %s12, 1
    %s18 = ssub.s32 %s12, 2
    %s25 = sadd.s32 1, %s20
    %p26 = scmp.ge.s32.totalorder %s25, 2
    %s27 = scalar_select %p26, 0, %s25
    %s28 = sadd.s32 1, %s19
    %s29 = scalar_select %p26, %s28, %s19
    %p30 = scmp.ge.s32.totalorder %s29, 1
    %s31 = scalar_select %p30, 0, %s29
    %s32 = ssub.s32 %s20, %s27
    %s33 = ssub.s32 %s19, %s31
    %s34 = sor.u32 %s32, %s33
    %p35 = scmp.eq.s32.totalorder %s34, 0
    %s37 = sadd.s32 %s36, 1
    %s38 = scalar_select %p35, %s36, %s37
    %p41 = pneg %p35
    %p42 = scmp.eq.s32.totalorder %s12, 1
    %p43 = por %p41, %p42
    %p44 = scmp.ne.s32.totalorder %s36, %s39
    %p45 = scmp.eq.s32.totalorder %s12, 0
    %p46 = por %p44, %p45
    %p47 = scmp.ne.s32.totalorder %s36, %s39
    %p48 = scmp.eq.s32.totalorder %s17, 1
    %p49 = por %p47, %p48
    %p50 = scmp.ne.s32.totalorder %s39, %s40
    %p51 = scmp.eq.s32.totalorder %s17, 0
    %p52 = por %p50, %p51
    %p53 = scmp.ne.s32.totalorder %s39, %s40
    %p54 = scmp.eq.s32.totalorder %s18, 1
    %p55 = por %p53, %p54
    %p57 = scmp.ne.s32.totalorder %s40, %s56
    %p58 = scmp.eq.s32.totalorder %s18, 0
    %p59 = por %p57, %p58
    %s61 = sadd.s32 %s60, 1
    %p64 = scmp.eq.s32.totalorder %s12, 1
    %p65 = scmp.ne.s32.totalorder %s60, %s62
    %p66 = scmp.eq.s32.totalorder %s12, 0
    %p67 = por %p65, %p66
    %p68 = scmp.ne.s32.totalorder %s60, %s62
    %p69 = scmp.eq.s32.totalorder %s17, 1
    %p70 = por %p68, %p69
    %p71 = scmp.ne.s32.totalorder %s62, %s63
    %p72 = scmp.eq.s32.totalorder %s17, 0
    %p73 = por %p71, %p72
    %p74 = scmp.ne.s32.totalorder %s62, %s63
    %p75 = scmp.eq.s32.totalorder %s18, 1
    %p76 = por %p74, %p75
    %p78 = scmp.ne.s32.totalorder %s63, %s77
    %p79 = scmp.eq.s32.totalorder %s18, 0
    %p80 = por %p78, %p79
    %s82 = sadd.s32 %s81, 1
    %p85 = scmp.eq.s32.totalorder %s12, 1
    %p86 = scmp.ne.s32.totalorder %s81, %s83
    %p87 = scmp.eq.s32.totalorder %s12, 0
    %p88 = por %p86, %p87
    %p89 = scmp.ne.s32.totalorder %s81, %s83
    %p90 = scmp.eq.s32.totalorder %s17, 1
    %p91 = por %p89, %p90
    %p92 = scmp.ne.s32.totalorder %s83, %s84
    %p93 = scmp.eq.s32.totalorder %s17, 0
    %p94 = por %p92, %p93
    %p95 = scmp.ne.s32.totalorder %s83, %s84
    %p96 = scmp.eq.s32.totalorder %s18, 1
    %p97 = por %p95, %p96
    %p99 = scmp.ne.s32.totalorder %s84, %s98
    %p100 = scmp.eq.s32.totalorder %s18, 0
    %p101 = por %p99, %p100
    %s103 = sadd.s32 %s102, 1
    %p106 = scmp.eq.s32.totalorder %s12, 1
    %p107 = scmp.ne.s32.totalorder %s102, %s104
    %p108 = scmp.eq.s32.totalorder %s12, 0
    %p109 = por %p107, %p108
    %p110 = scmp.ne.s32.totalorder %s102, %s104
    %p111 = scmp.eq.s32.totalorder %s17, 1
    %p112 = por %p110, %p111
    %p113 = scmp.ne.s32.totalorder %s104, %s105
    %p114 = scmp.eq.s32.totalorder %s17, 0
    %p115 = por %p113, %p114
    %p116 = scmp.ne.s32.totalorder %s104, %s105
    %p117 = scmp.eq.s32.totalorder %s18, 1
    %p118 = por %p116, %p117
    %p120 = scmp.ne.s32.totalorder %s105, %s119
    %p121 = scmp.eq.s32.totalorder %s18, 0
    %p122 = por %p120, %p121
    %s124 = sadd.s32 %s123, 1
    %p127 = scmp.eq.s32.totalorder %s12, 1
    %p128 = scmp.ne.s32.totalorder %s123, %s125
    %p129 = scmp.eq.s32.totalorder %s12, 0
    %p130 = por %p128, %p129
    %p131 = scmp.ne.s32.totalorder %s123, %s125
    %p132 = scmp.eq.s32.totalorder %s17, 1
    %p133 = por %p131, %p132
    %p134 = scmp.ne.s32.totalorder %s125, %s126
    %p135 = scmp.eq.s32.totalorder %s17, 0
    %p136 = por %p134, %p135
    %p137 = scmp.ne.s32.totalorder %s125, %s126
    %p138 = scmp.eq.s32.totalorder %s18, 1
    %p139 = por %p137, %p138
    %p141 = scmp.ne.s32.totalorder %s126, %s140
    %p142 = scmp.eq.s32.totalorder %s18, 0
    %p143 = por %p141, %p142
    %s145 = sadd.s32 %s144, 1
    %p148 = scmp.eq.s32.totalorder %s12, 1
    %p149 = scmp.ne.s32.totalorder %s144, %s146
    %p150 = scmp.eq.s32.totalorder %s12, 0
    %p151 = por %p149, %p150
    %p152 = scmp.ne.s32.totalorder %s144, %s146
    %p153 = scmp.eq.s32.totalorder %s17, 1
    %p154 = por %p152, %p153
    %p155 = scmp.ne.s32.totalorder %s146, %s147
    %p156 = scmp.eq.s32.totalorder %s17, 0
    %p157 = por %p155, %p156
    %p158 = scmp.ne.s32.totalorder %s146, %s147
    %p159 = scmp.eq.s32.totalorder %s18, 1
    %p160 = por %p158, %p159
    %p162 = scmp.ne.s32.totalorder %s147, %s161
    %p163 = scmp.eq.s32.totalorder %s18, 0
    %p164 = por %p162, %p163
    %s165 = ssub.s32 %s19, %s31
    %p166 = scmp.eq.s32.totalorder %s165, 0
    %s168 = sadd.s32 %s167, 1
    %s169 = scalar_select %p166, %s167, %s168
    %p172 = pneg %p166
    %p173 = scmp.eq.s32.totalorder %s12, 1
    %p174 = por %p172, %p173
    %p175 = scmp.ne.s32.totalorder %s167, %s170
    %p176 = scmp.eq.s32.totalorder %s12, 0
    %p177 = por %p175, %p176
    %p178 = scmp.ne.s32.totalorder %s167, %s170
    %p179 = scmp.eq.s32.totalorder %s17, 1
    %p180 = por %p178, %p179
    %p181 = scmp.ne.s32.totalorder %s170, %s171
    %p182 = scmp.eq.s32.totalorder %s17, 0
    %p183 = por %p181, %p182
    %p184 = scmp.ne.s32.totalorder %s170, %s171
    %p185 = scmp.eq.s32.totalorder %s18, 1
    %p186 = por %p184, %p185
    %p188 = scmp.ne.s32.totalorder %s171, %s187
    %p189 = scmp.eq.s32.totalorder %s18, 0
    %p190 = por %p188, %p189
    %p191 = scmp.le.s32.totalorder 1, %s12
    %p192 = scmp.lt.s32.totalorder %s12, 3
    %p193 = pnand %p191, %p192
    %p194 = pneg %p193
    // Predicated region
    $region9: #{tpu_custom_call.1} parent=5 // pred_check
      _
    $region10: #{tpu_custom_call.1} parent=5 // pred_check_branch
      %196 = sbr.rel (%p193) target = $region12
    $region11: #{tpu_custom_call.1} parent=5 // pred_region
      %s197 = ssub.s32 %s12, 1
      // Predicated region
      $region13: #{tpu_custom_call.1} parent=11 // pred_check
        %p198 = pneg %p73
      $region14: #{tpu_custom_call.1} parent=11 // pred_check_branch
        %200 = sbr.rel (%p198) target = $region16
      $region15: #{tpu_custom_call.1} parent=11 // pred_region
        _
      $region16: #{tpu_custom_call.1} parent=11 // pred_fallthru
        _
      // Predicated region
      $region17: #{tpu_custom_call.1} parent=11 // pred_check
        %p201 = pneg %p94
      $region18: #{tpu_custom_call.1} parent=11 // pred_check_branch
        %203 = sbr.rel (%p201) target = $region20
      $region19: #{tpu_custom_call.1} parent=11 // pred_region
        _
      $region20: #{tpu_custom_call.1} parent=11 // pred_fallthru
        _
      // Predicated region
      $region21: #{tpu_custom_call.1} parent=11 // pred_check
        %p204 = pneg %p115
      $region22: #{tpu_custom_call.1} parent=11 // pred_check_branch
        %206 = sbr.rel (%p204) target = $region24
      $region23: #{tpu_custom_call.1} parent=11 // pred_region
        _
      $region24: #{tpu_custom_call.1} parent=11 // pred_fallthru
        _
      // Predicated region
      $region25: #{tpu_custom_call.1} parent=11 // pred_check
        %p207 = pneg %p136
      $region26: #{tpu_custom_call.1} parent=11 // pred_check_branch
        %209 = sbr.rel (%p207) target = $region28
      $region27: #{tpu_custom_call.1} parent=11 // pred_region
        _
      $region28: #{tpu_custom_call.1} parent=11 // pred_fallthru
        _
      // Predicated region
      $region29: #{tpu_custom_call.1} parent=11 // pred_check
        %p210 = pneg %p157
      $region30: #{tpu_custom_call.1} parent=11 // pred_check_branch
        %212 = sbr.rel (%p210) target = $region32
      $region31: #{tpu_custom_call.1} parent=11 // pred_region
        _
      $region32: #{tpu_custom_call.1} parent=11 // pred_fallthru
        _
    $region12: #{tpu_custom_call.1} parent=5 // pred_fallthru
      _
    %p213 = scmp.lt.s32.totalorder %s12, 2
    // Predicated region
    $region33: #{tpu_custom_call.1} parent=5 // pred_check
      %p214 = pneg %p213
    $region34: #{tpu_custom_call.1} parent=5 // pred_check_branch
      %216 = sbr.rel (%p214) target = $region36
    $region35: #{tpu_custom_call.1} parent=5 // pred_region
      // Predicated region
      $region37: #{tpu_custom_call.1} parent=35 // pred_check
        %p217 = pneg %p46
      $region38: #{tpu_custom_call.1} parent=35 // pred_check_branch
        %219 = sbr.rel (%p217) target = $region40
      $region39: #{tpu_custom_call.1} parent=35 // pred_region
        %s220 = smul.u32 4, %s20
        %p221 = scmp.lt.s32.totalorder %s220, 7
        %s222 = scalar_select %p221, %s220, 7
        %p223 = scmp.lt.s32.totalorder %s19, 0
        %s224 = scalar_select %p223, %s19, 0
        %s225 = sadd.s32 %s224, %s222
        %s226 = smul.addr %s225, 8
        %s227 = scalar_lea.vmem %s0, %s226
        %s228 = smul.u32 4, %s20
      $region40: #{tpu_custom_call.1} parent=35 // pred_fallthru
        _
    $region36: #{tpu_custom_call.1} parent=5 // pred_fallthru
      _
    %p229 = scmp.le.s32.totalorder 1, %s12
    %p230 = scmp.lt.s32.totalorder %s12, 3
    %p231 = pnand %p229, %p230
    %p232 = pneg %p231
    // Predicated region
    $region41: #{tpu_custom_call.1} parent=5 // pred_check
      _
    $region42: #{tpu_custom_call.1} parent=5 // pred_check_branch
      %234 = sbr.rel (%p231) target = $region44
    $region43: #{tpu_custom_call.1} parent=5 // pred_region
      %s235 = ssub.s32 %s12, 1
      %s236 = smul.u32 4, %s22
      %p237 = scmp.lt.s32.totalorder %s236, 7
      %s238 = scalar_select %p237, %s236, 7
      %p239 = scmp.lt.s32.totalorder %s21, 0
      %s240 = scalar_select %p239, %s21, 0
      %s241 = sadd.s32 %s240, %s238
      %s242 = smul.addr %s241, 8
      %s243 = scalar_lea.vmem %s0, %s242
      %p244 = pneg %p52
      %p245 = pneg %p49
      %p246 = pneg %p73
      %p247 = pneg %p70
      %p248 = pneg %p94
      %p249 = pneg %p91
      %p250 = pneg %p115
      %p251 = pneg %p112
      %p252 = pneg %p136
      %p253 = pneg %p133
      %p254 = pneg %p157
      %p255 = pneg %p154
      %p256 = pneg %p183
      %p257 = pneg %p180
      %p258 = scmp.lt.s32.totalorder %s21, 0
      %s259 = scalar_select %p258, %s21, 0
      %s260 = smul.addr %s259, 8
      %s261 = scalar_lea.vmem %s6, %s260
      %s262 = smul.u32 4, %s22
      %p263 = scmp.lt.s32.totalorder %s262, 7
      %s264 = scalar_select %p263, %s262, 7
      %p265 = scmp.lt.s32.totalorder %s21, 0
      %s266 = scalar_select %p265, %s21, 0
      %s267 = sadd.s32 %s266, %s264
      %s268 = smul.addr %s267, 8
      %s269 = scalar_lea.vmem %s0, %s268
      %s270 = smul.u32 4, %s22
      %p271 = scmp.lt.s32.totalorder %s21, 0
      %s272 = scalar_select %p271, %s21, 0
      %s273 = smul.addr %s272, 8
      %s274 = scalar_lea.vmem %s6, %s273
      %p275 = scmp.eq.s32.totalorder %s22, 0
      // Predicated region
      $region45: #{tpu_custom_call.1} parent=43 // pred_check
        %p276 = pneg %p275
      $region46: #{tpu_custom_call.1} parent=43 // pred_check_branch
        %278 = sbr.rel (%p276) target = $region48
      $region47: #{tpu_custom_call.1} parent=43 // pred_region
        %vm279 = vcmask 261120
        %280 = vst.msk [vmem:[#allocation3] sm:$0xff] %vm279, 0.0
        %281 = vst.msk [vmem:[#allocation4] sm:$0xff] %vm279, 0.0
      $region48: #{tpu_custom_call.1} parent=43 // pred_fallthru
        _
      %v282 = vld [vmem:[%s269] sm:$0xff]
      %v283 = vld [vmem:[%s269 + $0x8] sm:$0xff]
      %v284 = vld [vmem:[%s269 + $0x10] sm:$0xff]
      %v285 = vld [vmem:[%s269 + $0x18] sm:$0xff]
      %v286 = vld [vmem:[%s1] sm:$0x3]
      %v287 = vld [vmem:[%s3] sm:$0x1]
      %v289 = vperm.slane %v287, 0
      %vm291 = vcmask 15360
      %v293 = vsel %vm291, %v282, 0
      %v296 = vsel %vm291, %v283, 0
      %v299 = vsel %vm291, %v284, 0
      %v302 = vsel %vm291, %v285, 0
      %vm304 = vcmask 1041408
      %v306 = vsel %vm304, %v286, 0
      %308 = vmatpush.msra.mxu0 0.0
      %309 = vmatpush.msra.mxu0 0.0
      %310 = vmatpush.msra.mxu0 0.0
      %311 = vmatpush.msra.mxu0 0.0
      %312 = vmatpush.msra.mxu0 0.0
      %313 = vmatpush.msra.mxu0 0.0
      %314 = vmatpush.msra.mxu0 0.0
      %315 = vmatpush.msra.mxu0 0.0
      %316 = vmatpush.msra.mxu0 0.0
      %317 = vmatpush.msra.mxu0 0.0
      %318 = vmatpush.msra.mxu0 0.0
      %319 = vmatpush.msra.mxu0 0.0
      %320 = vmatpush.msra.mxu0 0.0
      %321 = vmatpush.msra.mxu0 0.0
      %322 = vmatpush.msra.mxu0 0.0
      %323 = vmatpush.msra.mxu0 %v306
      %324 = vmatmul.f32.gmra.mxu0 %v293
      %v325 = vpop.f32.mrf.mxu0
      %v326 = vadd.f32 %v289, %v325
      %327 = vmatmul.f32.gmra.mxu0 %v296
      %v328 = vpop.f32.mrf.mxu0
      %v329 = vadd.f32 %v289, %v328
      %330 = vmatmul.f32.gmra.mxu0 %v299
      %v331 = vpop.f32.mrf.mxu0
      %v332 = vadd.f32 %v289, %v331
      %333 = vmatmul.f32.gmra.mxu0 %v302
      %v334 = vpop.f32.mrf.mxu0
      %v335 = vadd.f32 %v289, %v334
      %336 = vdwg.mxu0
      %337 = vst [vmem:[#allocation2] sm:$0xff] %v326
      %338 = vst [vmem:[#allocation2 + $0x8] sm:$0xff] %v329
      %339 = vst [vmem:[#allocation2 + $0x10] sm:$0xff] %v332
      %340 = vst [vmem:[#allocation2 + $0x18] sm:$0xff] %v335
      %v341 = vld [vmem:[%s2] sm:$0xff]
      %v342 = vld [vmem:[%s2 + $0x8] sm:$0xff]
      %v343 = vld [vmem:[%s2 + $0x10] sm:$0xff]
      %v344 = vld [vmem:[%s2 + $0x18] sm:$0xff]
      %v345 = vlaneseq
      %v346 = vand.u32 %v345, 127
      %vm347 = vcmp.ge.s32.totalorder %v346, 64
      %vm348 = vcmp.lt.s32.totalorder %v346, 96
      %vm349 = vmand %vm347, %vm348
      %v350 = vld [vmem:[#allocation3] sm:$0xff]
      %v351 = vld [vmem:[#allocation4] sm:$0xff]
      %v352 = vld [vmem:[#allocation2] sm:$0xff]
      %vm353 = vcmask 261120
      %v355 = vsel %vm353, %v350, 0
      %357 = vmatpush.msra.mxu0 0.0
      %358 = vmatpush.msra.mxu0 0.0
      %359 = vmatpush.msra.mxu0 0.0
      %360 = vmatpush.msra.mxu0 0.0
      %361 = vmatpush.msra.mxu0 0.0
      %362 = vmatpush.msra.mxu0 0.0
      %363 = vmatpush.msra.mxu0 0.0
      %364 = vmatpush.msra.mxu0 0.0
      %365 = vmatpush.msra.mxu0 0.0
      %366 = vmatpush.msra.mxu0 0.0
      %367 = vmatpush.msra.mxu0 0.0
      %368 = vmatpush.msra.mxu0 0.0
      %369 = vmatpush.msra.mxu0 %v344
      %370 = vmatpush.msra.mxu0 %v343
      %371 = vmatpush.msra.mxu0 %v342
      %372 = vmatpush.msra.mxu0 %v341
      %373 = vmatmul.f32.gmra.mxu0 %v355
      %v374 = vpop.f32.mrf.mxu0
      %v375 = vadd.f32 0.0, %v374
      %376 = vdwg.mxu0
      %v377 = vadd.f32 %v352, %v375
      %v378 = vtanh.pop %v377
      %v379 = vxor.u32 %v377, 2147483648
      %v380 = vmul.f32 %v379, 1.442695
      %v381 = vpow.pop %v380
      %v382 = vadd.f32 %v381, 1.0
      %v383 = vrcp.pop %v382
      %v384 = vmul.f32 %v382, %v383
      %v385 = vsub.f32 1.0, %v384
      %v386 = vmul.f32 %v383, %v385
      %v387 = vadd.f32 %v383, %v386
      %vm388 = vweird.f32 %v382
      %vm389 = vweird.f32 %v383
      %vm390 = vmor %vm388, %vm389
      %v391 = vsel %vm390, %v383, %v387
      %v392 = vand.u32 2147483647, %v382
      %vm393 = vcmp.eq.f32.partialorder %v392, 8.507059e+37
      %v394 = vand.u32 %v382, 2147483648
      %v395 = vor.u32 1.1754944e-38, %v394
      %v396 = vsel %vm393, %v395, %v391
      %v397 = vmul.f32 1.0, %v396
      %v398 = vsel %vm349, %v378, %v397
      %400 = vrot.lane.b32.xlu0 %v351, 32
      %v401 = vpop.permute.xlu0 %400
      %v403 = vmul.f32 %v398, %v401
      %405 = vrot.lane.b32.xlu0 %v398, 64
      %v406 = vpop.permute.xlu0 %405
      %v408 = vmul.f32 %v398, %v406
      %410 = vrot.lane.b32.xlu0 %v408, 32
      %v411 = vpop.permute.xlu0 %410
      %v413 = vadd.f32 %v403, %v411
      %v414 = vtanh.pop %v413
      %416 = vrot.lane.b32.xlu0 %v414, 64
      %v417 = vpop.permute.xlu0 %416
      %v419 = vmul.f32 %v398, %v417
      %s420 = scalar_lea.vmem [#allocation2], 8
      %v421 = vld [vmem:[%s420] sm:$0xff]
      %423 = vrot.lane.b32.xlu0 %v419, 32
      %v424 = vpop.permute.xlu0 %423
      %v425 = vsel %vm353, %v424, 0
      %427 = vmatpush.msra.mxu0 0.0
      %428 = vmatpush.msra.mxu0 0.0
      %429 = vmatpush.msra.mxu0 0.0
      %430 = vmatpush.msra.mxu0 0.0
      %431 = vmatpush.msra.mxu0 0.0
      %432 = vmatpush.msra.mxu0 0.0
      %433 = vmatpush.msra.mxu0 0.0
      %434 = vmatpush.msra.mxu0 0.0
      %435 = vmatpush.msra.mxu0 0.0
      %436 = vmatpush.msra.mxu0 0.0
      %437 = vmatpush.msra.mxu0 0.0
      %438 = vmatpush.msra.mxu0 0.0
      %439 = vmatpush.msra.mxu0 %v344
      %440 = vmatpush.msra.mxu0 %v343
      %441 = vmatpush.msra.mxu0 %v342
      %442 = vmatpush.msra.mxu0 %v341
      %443 = vmatmul.f32.gmra.mxu0 %v425
      %v444 = vpop.f32.mrf.mxu0
      %v445 = vadd.f32 0.0, %v444
      %446 = vdwg.mxu0
      %v447 = vadd.f32 %v421, %v445
      %v448 = vtanh.pop %v447
      %v449 = vxor.u32 %v447, 2147483648
      %v450 = vmul.f32 %v449, 1.442695
      %v451 = vpow.pop %v450
      %v452 = vadd.f32 %v451, 1.0
      %v453 = vrcp.pop %v452
      %v454 = vmul.f32 %v452, %v453
      %v455 = vsub.f32 1.0, %v454
      %v456 = vmul.f32 %v453, %v455
      %v457 = vadd.f32 %v453, %v456
      %vm458 = vweird.f32 %v452
      %vm459 = vweird.f32 %v453
      %vm460 = vmor %vm458, %vm459
      %v461 = vsel %vm460, %v453, %v457
      %v462 = vand.u32 2147483647, %v452
      %vm463 = vcmp.eq.f32.partialorder %v462, 8.507059e+37
      %v464 = vand.u32 %v452, 2147483648
      %v465 = vor.u32 1.1754944e-38, %v464
      %v466 = vsel %vm463, %v465, %v461
      %v467 = vmul.f32 1.0, %v466
      %v468 = vsel %vm349, %v448, %v467
      %v469 = vmul.f32 %v468, %v413
      %471 = vrot.lane.b32.xlu0 %v468, 64
      %v472 = vpop.permute.xlu0 %471
      %v474 = vmul.f32 %v468, %v472
      %476 = vrot.lane.b32.xlu0 %v474, 32
      %v477 = vpop.permute.xlu0 %476
      %v479 = vadd.f32 %v469, %v477
      %v480 = vtanh.pop %v479
      %482 = vrot.lane.b32.xlu0 %v480, 64
      %v483 = vpop.permute.xlu0 %482
      %v485 = vmul.f32 %v468, %v483
      %s486 = scalar_lea.vmem [#allocation2], 16
      %v487 = vld [vmem:[%s486] sm:$0xff]
      %489 = vrot.lane.b32.xlu0 %v485, 32
      %v490 = vpop.permute.xlu0 %489
      %v491 = vsel %vm353, %v490, 0
      %493 = vmatpush.msra.mxu0 0.0
      %494 = vmatpush.msra.mxu0 0.0
      %495 = vmatpush.msra.mxu0 0.0
      %496 = vmatpush.msra.mxu0 0.0
      %497 = vmatpush.msra.mxu0 0.0
      %498 = vmatpush.msra.mxu0 0.0
      %499 = vmatpush.msra.mxu0 0.0
      %500 = vmatpush.msra.mxu0 0.0
      %501 = vmatpush.msra.mxu0 0.0
      %502 = vmatpush.msra.mxu0 0.0
      %503 = vmatpush.msra.mxu0 0.0
      %504 = vmatpush.msra.mxu0 0.0
      %505 = vmatpush.msra.mxu0 %v344
      %506 = vmatpush.msra.mxu0 %v343
      %507 = vmatpush.msra.mxu0 %v342
      %508 = vmatpush.msra.mxu0 %v341
      %509 = vmatmul.f32.gmra.mxu0 %v491
      %v510 = vpop.f32.mrf.mxu0
      %v511 = vadd.f32 0.0, %v510
      %512 = vdwg.mxu0
      %v513 = vadd.f32 %v487, %v511
      %v514 = vtanh.pop %v513
      %v515 = vxor.u32 %v513, 2147483648
      %v516 = vmul.f32 %v515, 1.442695
      %v517 = vpow.pop %v516
      %v518 = vadd.f32 %v517, 1.0
      %v519 = vrcp.pop %v518
      %v520 = vmul.f32 %v518, %v519
      %v521 = vsub.f32 1.0, %v520
      %v522 = vmul.f32 %v519, %v521
      %v523 = vadd.f32 %v519, %v522
      %vm524 = vweird.f32 %v518
      %vm525 = vweird.f32 %v519
      %vm526 = vmor %vm524, %vm525
      %v527 = vsel %vm526, %v519, %v523
      %v528 = vand.u32 2147483647, %v518
      %vm529 = vcmp.eq.f32.partialorder %v528, 8.507059e+37
      %v530 = vand.u32 %v518, 2147483648
      %v531 = vor.u32 1.1754944e-38, %v530
      %v532 = vsel %vm529, %v531, %v527
      %v533 = vmul.f32 1.0, %v532
      %v534 = vsel %vm349, %v514, %v533
      %v535 = vmul.f32 %v534, %v479
      %537 = vrot.lane.b32.xlu0 %v534, 64
      %v538 = vpop.permute.xlu0 %537
      %v540 = vmul.f32 %v534, %v538
      %542 = vrot.lane.b32.xlu0 %v540, 32
      %v543 = vpop.permute.xlu0 %542
      %v545 = vadd.f32 %v535, %v543
      %v546 = vtanh.pop %v545
      %548 = vrot.lane.b32.xlu0 %v546, 64
      %v549 = vpop.permute.xlu0 %548
      %v551 = vmul.f32 %v534, %v549
      %s552 = scalar_lea.vmem [#allocation2], 24
      %v553 = vld [vmem:[%s552] sm:$0xff]
      %555 = vrot.lane.b32.xlu0 %v551, 32
      %v556 = vpop.permute.xlu0 %555
      %v557 = vsel %vm353, %v556, 0
      %559 = vmatpush.msra.mxu0 0.0
      %560 = vmatpush.msra.mxu0 0.0
      %561 = vmatpush.msra.mxu0 0.0
      %562 = vmatpush.msra.mxu0 0.0
      %563 = vmatpush.msra.mxu0 0.0
      %564 = vmatpush.msra.mxu0 0.0
      %565 = vmatpush.msra.mxu0 0.0
      %566 = vmatpush.msra.mxu0 0.0
      %567 = vmatpush.msra.mxu0 0.0
      %568 = vmatpush.msra.mxu0 0.0
      %569 = vmatpush.msra.mxu0 0.0
      %570 = vmatpush.msra.mxu0 0.0
      %571 = vmatpush.msra.mxu0 %v344
      %572 = vmatpush.msra.mxu0 %v343
      %573 = vmatpush.msra.mxu0 %v342
      %574 = vmatpush.msra.mxu0 %v341
      %575 = vmatmul.f32.gmra.mxu0 %v557
      %v576 = vpop.f32.mrf.mxu0
      %v577 = vadd.f32 0.0, %v576
      %578 = vdwg.mxu0
      %v579 = vadd.f32 %v553, %v577
      %v580 = vtanh.pop %v579
      %v581 = vxor.u32 %v579, 2147483648
      %v582 = vmul.f32 %v581, 1.442695
      %v583 = vpow.pop %v582
      %v584 = vadd.f32 %v583, 1.0
      %v585 = vrcp.pop %v584
      %v586 = vmul.f32 %v584, %v585
      %v587 = vsub.f32 1.0, %v586
      %v588 = vmul.f32 %v585, %v587
      %v589 = vadd.f32 %v585, %v588
      %vm590 = vweird.f32 %v584
      %vm591 = vweird.f32 %v585
      %vm592 = vmor %vm590, %vm591
      %v593 = vsel %vm592, %v585, %v589
      %v594 = vand.u32 2147483647, %v584
      %vm595 = vcmp.eq.f32.partialorder %v594, 8.507059e+37
      %v596 = vand.u32 %v584, 2147483648
      %v597 = vor.u32 1.1754944e-38, %v596
      %v598 = vsel %vm595, %v597, %v593
      %v599 = vmul.f32 1.0, %v598
      %v600 = vsel %vm349, %v580, %v599
      %v601 = vmul.f32 %v600, %v545
      %603 = vrot.lane.b32.xlu0 %v600, 64
      %v604 = vpop.permute.xlu0 %603
      %v606 = vmul.f32 %v600, %v604
      %608 = vrot.lane.b32.xlu0 %v606, 32
      %v609 = vpop.permute.xlu0 %608
      %v611 = vadd.f32 %v601, %v609
      %v612 = vtanh.pop %v611
      %614 = vrot.lane.b32.xlu0 %v612, 64
      %v615 = vpop.permute.xlu0 %614
      %v617 = vmul.f32 %v600, %v615
      %619 = vrot.lane.b32.xlu0 %v617, 32
      %v620 = vpop.permute.xlu0 %619
      %622 = vst.msk [vmem:[#allocation3] sm:$0xff] %vm353, %v620
      %624 = vrot.lane.b32.xlu0 %v611, 96
      %v625 = vpop.permute.xlu0 %624
      %627 = vst.msk [vmem:[#allocation4] sm:$0xff] %vm353, %v625
      %p628 = scmp.eq.s32.totalorder %s22, 1
      // Predicated region
      $region49: #{tpu_custom_call.1} parent=43 // pred_check
        %p629 = pneg %p628
      $region50: #{tpu_custom_call.1} parent=43 // pred_check_branch
        %631 = sbr.rel (%p629) target = $region52
      $region51: #{tpu_custom_call.1} parent=43 // pred_region
        %v632 = vld [vmem:[%s4] sm:$0xff]
        %v633 = vld [vmem:[%s4 + $0x8] sm:$0xff]
        %v634 = vld [vmem:[%s4 + $0x10] sm:$0xff]
        %v635 = vld [vmem:[%s4 + $0x18] sm:$0xff]
        %v636 = vld [vmem:[%s5] sm:$0x1]
        %v638 = vperm.slane %v636, 0
        %v640 = vsel %vm353, %v620, 0
        %642 = vmatpush.msra.mxu0 0.0
        %643 = vmatpush.msra.mxu0 0.0
        %644 = vmatpush.msra.mxu0 0.0
        %645 = vmatpush.msra.mxu0 0.0
        %646 = vmatpush.msra.mxu0 0.0
        %647 = vmatpush.msra.mxu0 0.0
        %648 = vmatpush.msra.mxu0 0.0
        %649 = vmatpush.msra.mxu0 0.0
        %650 = vmatpush.msra.mxu0 0.0
        %651 = vmatpush.msra.mxu0 0.0
        %652 = vmatpush.msra.mxu0 0.0
        %653 = vmatpush.msra.mxu0 0.0
        %654 = vmatpush.msra.mxu0 %v635
        %655 = vmatpush.msra.mxu0 %v634
        %656 = vmatpush.msra.mxu0 %v633
        %657 = vmatpush.msra.mxu0 %v632
        %658 = vmatmul.f32.gmra.mxu0 %v640
        %v659 = vpop.f32.mrf.mxu0
        %v660 = vadd.f32 %v638, %v659
        %661 = vdwg.mxu0
        %vm662 = vcmask 31744
        %663 = vst.msk [vmem:[%s274] sm:$0xff] %vm662, %v660
      $region52: #{tpu_custom_call.1} parent=43 // pred_fallthru
        _
      %p664 = scmp.lt.s32.totalorder %s21, 0
      %s665 = scalar_select %p664, %s21, 0
      %s666 = smul.addr %s665, 8
      %s667 = scalar_lea.vmem %s6, %s666
      // Predicated region
      $region53: #{tpu_custom_call.1} parent=43 // pred_check
        %p668 = pneg %p180
      $region54: #{tpu_custom_call.1} parent=43 // pred_check_branch
        %670 = sbr.rel (%p668) target = $region56
      $region55: #{tpu_custom_call.1} parent=43 // pred_region
        _
      $region56: #{tpu_custom_call.1} parent=43 // pred_fallthru
        _
      // Predicated region
      $region57: #{tpu_custom_call.1} parent=43 // pred_check
        %p671 = pneg %p180
      $region58: #{tpu_custom_call.1} parent=43 // pred_check_branch
        %673 = sbr.rel (%p671) target = $region60
      $region59: #{tpu_custom_call.1} parent=43 // pred_region
        %p674 = scmp.lt.s32.totalorder %s21, 0
        %s675 = scalar_select %p674, %s21, 0
        %s676 = smul.addr %s675, 8
        %s677 = scalar_lea.vmem %s6, %s676
      $region60: #{tpu_custom_call.1} parent=43 // pred_fallthru
        _
    $region44: #{tpu_custom_call.1} parent=5 // pred_fallthru
      _
    %p678 = scmp.le.s32.totalorder 2, %s12
    // Predicated region
    $region61: #{tpu_custom_call.1} parent=5 // pred_check
      %p679 = pneg %p678
    $region62: #{tpu_custom_call.1} parent=5 // pred_check_branch
      %681 = sbr.rel (%p679) target = $region64
    $region63: #{tpu_custom_call.1} parent=5 // pred_region
      %s682 = ssub.s32 %s12, 2
    $region64: #{tpu_custom_call.1} parent=5 // pred_fallthru
      _
  $region6: #{tpu_custom_call.1} parent=0 // loop_footer
    %s16 = sadd.s32 1, %s12
  $region7: #{tpu_custom_call.1} parent=0 // loop_footer_branch
    %11 = sbr.rel target = $region3
  $region8: #{tpu_custom_call.1} parent=0 // loop_exit
    _

</llo_original>
